<compile_context>
chip_gen: v7x
topology: tpu7x:2x2x1
jax: 0.10.0
libtpu: 0.0.40
codegen_flags: <defaults>
</compile_context>

<pallas_src>
import functools
import math

import jax
import jax.numpy as jnp
from jax.experimental import pallas as pl
from jax.experimental.pallas import tpu as pltpu


# --------------------------------------------------------------- shared math
def _ln_math(x, g, b, eps):
    # torch.Tensor.std() is the *unbiased* estimator (ddof=1) and the module
    # divides by (std + eps), not sqrt(var + eps) -- keep exact semantics.
    d = x.shape[-1]
    mean = jnp.mean(x, axis=-1, keepdims=True)
    diff = x - mean
    var = jnp.sum(diff * diff, axis=-1, keepdims=True) / (d - 1)
    std = jnp.sqrt(var)
    return g * diff / (std + eps) + b


def _pick_row_tile(m):
    """Rows are independent for LN / linear -- tile big blocks when m is large."""
    if m <= 512:
        return m
    for t in (512, 256, 128):
        if m % t == 0:
            return t
    return m


# --------------------------------------------------- LayerNorm + Linear (fused)
def _ln_proj_kernel(x_ref, g_ref, b_ref, w_ref, bias_ref, o_ref, *, eps):
    x = x_ref[...].astype(jnp.float32)                       # (TM, D)
    y = _ln_math(x, g_ref[...], b_ref[...], eps)
    acc = jnp.dot(y, w_ref[...], preferred_element_type=jnp.float32)
    o_ref[...] = (acc + bias_ref[...]).astype(o_ref.dtype)


def ln_project(x, gamma, beta, w, bias, eps=1e-6):
    m, d = x.shape
    n = w.shape[1]
    tm = _pick_row_tile(m)
    return pl.pallas_call(
        functools.partial(_ln_proj_kernel, eps=eps),
        out_shape=jax.ShapeDtypeStruct((m, n), x.dtype),
        grid=(m // tm,),
        in_specs=[
            pl.BlockSpec((tm, d), lambda i: (i, 0)),
            pl.BlockSpec((1, d), lambda i: (0, 0)),
            pl.BlockSpec((1, d), lambda i: (0, 0)),
            pl.BlockSpec((d, n), lambda i: (0, 0)),
            pl.BlockSpec((1, n), lambda i: (0, 0)),
        ],
        out_specs=pl.BlockSpec((tm, n), lambda i: (i, 0)),
        compiler_params=pltpu.CompilerParams(dimension_semantics=("parallel",)),
    )(
        x,
        gamma.reshape(1, d).astype(jnp.float32),
        beta.reshape(1, d).astype(jnp.float32),
        w,
        bias.reshape(1, n),
    )


# ---------------------------------------------------------------------- Linear
def _proj_kernel(x_ref, w_ref, bias_ref, o_ref):
    acc = jnp.dot(x_ref[...], w_ref[...], preferred_element_type=jnp.float32)
    o_ref[...] = (acc + bias_ref[...]).astype(o_ref.dtype)


def _proj_res_kernel(x_ref, w_ref, bias_ref, r_ref, o_ref):
    acc = jnp.dot(x_ref[...], w_ref[...], preferred_element_type=jnp.float32)
    o_ref[...] = (acc + bias_ref[...] + r_ref[...]).astype(o_ref.dtype)


def project(x, w, bias, residual=None):
    m, k = x.shape
    n = w.shape[1]
    tm = _pick_row_tile(m)
    b2 = bias.reshape(1, n)
    if residual is None:
        return pl.pallas_call(
            _proj_kernel,
            out_shape=jax.ShapeDtypeStruct((m, n), x.dtype),
            grid=(m // tm,),
            in_specs=[
                pl.BlockSpec((tm, k), lambda i: (i, 0)),
                pl.BlockSpec((k, n), lambda i: (0, 0)),
                pl.BlockSpec((1, n), lambda i: (0, 0)),
            ],
            out_specs=pl.BlockSpec((tm, n), lambda i: (i, 0)),
            compiler_params=pltpu.CompilerParams(dimension_semantics=("parallel",)),
        )(x, w, b2)
    return pl.pallas_call(
        _proj_res_kernel,
        out_shape=jax.ShapeDtypeStruct((m, n), x.dtype),
        grid=(m // tm,),
        in_specs=[
            pl.BlockSpec((tm, k), lambda i: (i, 0)),
            pl.BlockSpec((k, n), lambda i: (0, 0)),
            pl.BlockSpec((1, n), lambda i: (0, 0)),
            pl.BlockSpec((tm, n), lambda i: (i, 0)),
        ],
        out_specs=pl.BlockSpec((tm, n), lambda i: (i, 0)),
        compiler_params=pltpu.CompilerParams(dimension_semantics=("parallel",)),
    )(x, w, b2, residual)


# ------------------------------------------------------------------- Attention
def _mha_kernel(q_ref, k_ref, v_ref, m_ref, o_ref, *, scale):
    q = q_ref[...].astype(jnp.float32)                       # (H, Sq, dk)
    k = k_ref[...].astype(jnp.float32)                       # (H, Sk, dk)
    v = v_ref[...].astype(jnp.float32)                       # (H, Sk, dk)
    s = jnp.einsum("hqd,hkd->hqk", q, k,
                   preferred_element_type=jnp.float32) * scale     # (H, Sq, Sk)
    s = jnp.where(m_ref[...][None, :, :] == 0, jnp.float32(-1e9), s)
    s = s - jnp.max(s, axis=-1, keepdims=True)
    p = jnp.exp(s)
    p = p / jnp.sum(p, axis=-1, keepdims=True)
    o = jnp.einsum("hqk,hkd->hqd", p, v, preferred_element_type=jnp.float32)
    o_ref[...] = o.astype(o_ref.dtype)


def multihead_attention(q, k, v, mask, batch, s_q, s_k, heads, d_k):
    """q,k,v: (B*S, D) projected activations; mask: (B, 1|s_q, s_k)."""
    d = heads * d_k
    qh = q.reshape(batch, s_q, heads, d_k).transpose(0, 2, 1, 3)   # (B,H,Sq,dk)
    kh = k.reshape(batch, s_k, heads, d_k).transpose(0, 2, 1, 3)
    vh = v.reshape(batch, s_k, heads, d_k).transpose(0, 2, 1, 3)
    mh = jnp.broadcast_to(mask.astype(jnp.int32), (batch, s_q, s_k))

    out = pl.pallas_call(
        functools.partial(_mha_kernel, scale=1.0 / math.sqrt(d_k)),
        out_shape=jax.ShapeDtypeStruct((batch, heads, s_q, d_k), q.dtype),
        grid=(batch,),
        in_specs=[
            pl.BlockSpec((None, heads, s_q, d_k), lambda b: (b, 0, 0, 0)),
            pl.BlockSpec((None, heads, s_k, d_k), lambda b: (b, 0, 0, 0)),
            pl.BlockSpec((None, heads, s_k, d_k), lambda b: (b, 0, 0, 0)),
            pl.BlockSpec((None, s_q, s_k), lambda b: (b, 0, 0)),
        ],
        out_specs=pl.BlockSpec((None, heads, s_q, d_k), lambda b: (b, 0, 0, 0)),
        compiler_params=pltpu.CompilerParams(dimension_semantics=("parallel",)),
    )(qh, kh, vh, mh)
    return out.transpose(0, 2, 1, 3).reshape(batch * s_q, d)


# --------------------------------------------- LayerNorm + FFN + residual (fused)
def _ln_ffn_res_kernel(x_ref, g_ref, b_ref, w1_ref, b1_ref, w2_ref, b2_ref,
                       o_ref, *, eps):
    x = x_ref[...].astype(jnp.float32)                       # (TM, D)
    y = _ln_math(x, g_ref[...], b_ref[...], eps)
    h = jnp.dot(y, w1_ref[...], preferred_element_type=jnp.float32) + b1_ref[...]
    h = jnp.maximum(h, 0.0)
    out = jnp.dot(h, w2_ref[...], preferred_element_type=jnp.float32) + b2_ref[...]
    o_ref[...] = (out + x).astype(o_ref.dtype)               # residual = raw x


def ln_ffn_residual(x, gamma, beta, w1, b1, w2, b2, eps=1e-6):
    m, d = x.shape
    f = w1.shape[1]
    tm = _pick_row_tile(m)
    return pl.pallas_call(
        functools.partial(_ln_ffn_res_kernel, eps=eps),
        out_shape=jax.ShapeDtypeStruct((m, d), x.dtype),
        grid=(m // tm,),
        in_specs=[
            pl.BlockSpec((tm, d), lambda i: (i, 0)),
            pl.BlockSpec((1, d), lambda i: (0, 0)),
            pl.BlockSpec((1, d), lambda i: (0, 0)),
            pl.BlockSpec((d, f), lambda i: (0, 0)),
            pl.BlockSpec((1, f), lambda i: (0, 0)),
            pl.BlockSpec((f, d), lambda i: (0, 0)),
            pl.BlockSpec((1, d), lambda i: (0, 0)),
        ],
        out_specs=pl.BlockSpec((tm, d), lambda i: (i, 0)),
        compiler_params=pltpu.CompilerParams(dimension_semantics=("parallel",)),
    )(
        x,
        gamma.reshape(1, d).astype(jnp.float32),
        beta.reshape(1, d).astype(jnp.float32),
        w1, b1.reshape(1, f), w2, b2.reshape(1, d),
    )


# ---------------------------------------------------------------- DecoderLayer
def decoder_layer_forward(x, memory, src_mask, tgt_mask, p):
    """Exact forward of the PyTorch DecoderLayer (dropout = identity)."""
    b, s_t, d = x.shape
    _, s_s, _ = memory.shape
    h = p["heads"]
    d_k = d // h
    x2 = x.reshape(b * s_t, d)
    m2 = memory.reshape(b * s_s, d)

    # Pre-fuse projection weights (layout plumbing, one concat per call).
    self_wqkv = jnp.concatenate([p["self_wq"], p["self_wk"], p["self_wv"]], axis=1)
    self_bqkv = jnp.concatenate([p["self_bq"], p["self_bk"], p["self_bv"]])
    src_wkv = jnp.concatenate([p["src_wk"], p["src_wv"]], axis=1)
    src_bkv = jnp.concatenate([p["src_bk"], p["src_bv"]])

    # ---- sublayer 0: x + self_attn(LN0(x), LN0(x), LN0(x), tgt_mask) -------
    qkv = ln_project(x2, p["ln0_g"], p["ln0_b"], self_wqkv, self_bqkv)
    q, k, v = qkv[:, :d], qkv[:, d:2 * d], qkv[:, 2 * d:]
    a = multihead_attention(q, k, v, tgt_mask, b, s_t, s_t, h, d_k)
    x2 = project(a, p["self_wo"], p["self_bo"], residual=x2)   # residual fused
    # TODO(synk): nn.Dropout is treated as identity (eval / inference mode).

    # ---- sublayer 1: x + src_attn(LN1(x), memory, memory, src_mask) --------
    q = ln_project(x2, p["ln1_g"], p["ln1_b"], p["src_wq"], p["src_bq"])
    kv = project(m2, src_wkv, src_bkv)
    k, v = kv[:, :d], kv[:, d:]
    a = multihead_attention(q, k, v, src_mask, b, s_t, s_s, h, d_k)
    x2 = project(a, p["src_wo"], p["src_bo"], residual=x2)

    # ---- sublayer 2: x + feed_fwd(LN2(x)) -----------------------------------
    x2 = ln_ffn_residual(x2, p["ln2_g"], p["ln2_b"],
                         p["ff_w1"], p["ff_b1"], p["ff_w2"], p["ff_b2"])

    return x2.reshape(b, s_t, d)


# ------------------------------------------------------ pure-JAX reference
def _reference(x, memory, src_mask, tgt_mask, p):
    def ln(t, g, b, eps=1e-6):
        mean = t.mean(-1, keepdims=True)
        diff = t - mean
        std = jnp.sqrt((diff * diff).sum(-1, keepdims=True) / (t.shape[-1] - 1))
        return g * diff / (std + eps) + b

    def attn(q, k, v, mask, heads):
        bsz, sq, d = q.shape
        sk = k.shape[1]
        dk = d // heads
        qh = q.reshape(bsz, sq, heads, dk).transpose(0, 2, 1, 3)
        kh = k.reshape(bsz, sk, heads, dk).transpose(0, 2, 1, 3)
        vh = v.reshape(bsz, sk, heads, dk).transpose(0, 2, 1, 3)
        s = jnp.einsum("bhqd,bhkd->bhqk", qh, kh) / math.sqrt(dk)
        s = jnp.where(mask[:, None, :, :] == 0, -1e9, s)
        pr = jax.nn.softmax(s, axis=-1)
        o = jnp.einsum("bhqk,bhkd->bhqd", pr, vh)
        return o.transpose(0, 2, 1, 3).reshape(bsz, sq, d)

    h = p["heads"]
    xn = ln(x, p["ln0_g"], p["ln0_b"])
    q = xn @ p["self_wq"] + p["self_bq"]
    k = xn @ p["self_wk"] + p["self_bk"]
    v = xn @ p["self_wv"] + p["self_bv"]
    x = x + (attn(q, k, v, tgt_mask, h) @ p["self_wo"] + p["self_bo"])
    xn = ln(x, p["ln1_g"], p["ln1_b"])
    q = xn @ p["src_wq"] + p["src_bq"]
    k = memory @ p["src_wk"] + p["src_bk"]
    v = memory @ p["src_wv"] + p["src_bv"]
    x = x + (attn(q, k, v, src_mask, h) @ p["src_wo"] + p["src_bo"])
    xn = ln(x, p["ln2_g"], p["ln2_b"])
    x = x + (jnp.maximum(xn @ p["ff_w1"] + p["ff_b1"], 0.0) @ p["ff_w2"] + p["ff_b2"])
    return x


if __name__ == "__main__":
    key = jax.random.PRNGKey(0)
    B, S_T, S_S, D, H, F = 2, 8, 8, 32, 4, 64

    ks = jax.random.split(key, 16)

    def w(i, shape, scale):
        return scale * jax.random.normal(ks[i], shape, jnp.float32)

    sc = 1.0 / math.sqrt(D)
    params = {
        "heads": H,
        "ln0_g": jnp.ones((D,), jnp.float32), "ln0_b": jnp.zeros((D,), jnp.float32),
        "ln1_g": jnp.ones((D,), jnp.float32), "ln1_b": jnp.zeros((D,), jnp.float32),
        "ln2_g": jnp.ones((D,), jnp.float32), "ln2_b": jnp.zeros((D,), jnp.float32),
        "self_wq": w(0, (D, D), sc), "self_bq": jnp.zeros((D,), jnp.float32),
        "self_wk": w(1, (D, D), sc), "self_bk": jnp.zeros((D,), jnp.float32),
        "self_wv": w(2, (D, D), sc), "self_bv": jnp.zeros((D,), jnp.float32),
        "self_wo": w(3, (D, D), sc), "self_bo": jnp.zeros((D,), jnp.float32),
        "src_wq": w(4, (D, D), sc), "src_bq": jnp.zeros((D,), jnp.float32),
        "src_wk": w(5, (D, D), sc), "src_bk": jnp.zeros((D,), jnp.float32),
        "src_wv": w(6, (D, D), sc), "src_bv": jnp.zeros((D,), jnp.float32),
        "src_wo": w(7, (D, D), sc), "src_bo": jnp.zeros((D,), jnp.float32),
        "ff_w1": w(8, (D, F), sc), "ff_b1": jnp.zeros((F,), jnp.float32),
        "ff_w2": w(9, (F, D), 1.0 / math.sqrt(F)), "ff_b2": jnp.zeros((D,), jnp.float32),
    }

    x = jax.random.normal(ks[10], (B, S_T, D), jnp.float32)
    memory = jax.random.normal(ks[11], (B, S_S, D), jnp.float32)
    tgt_mask = jnp.broadcast_to(
        jnp.tril(jnp.ones((S_T, S_T), jnp.int32)), (B, S_T, S_T))   # causal mask
    src_mask = jnp.ones((B, 1, S_S), jnp.int32)                     # no source padding

    out = decoder_layer_forward(x, memory, src_mask, tgt_mask, params)
    jax.block_until_ready(out)
    assert out.shape == (B, S_T, D)
    assert bool(jnp.all(jnp.isfinite(out)))

    ref = _reference(x, memory, src_mask, tgt_mask, params)
    assert bool(jnp.allclose(out, ref, atol=1e-4, rtol=1e-4)), "mismatch vs JAX reference"
    print("KERNEL_OK")
</pallas_src>

<mosaic_0001>
module attributes {stable_mosaic.version = 11 : i64} {
  func.func @_ln_proj_kernel(%arg0: i32, %arg1: memref<16x32xf32, #tpu.memory_space<vmem>>, %arg2: memref<1x32xf32, #tpu.memory_space<vmem>>, %arg3: memref<1x32xf32, #tpu.memory_space<vmem>>, %arg4: memref<32x96xf32, #tpu.memory_space<vmem>>, %arg5: memref<1x96xf32, #tpu.memory_space<vmem>>, %arg6: memref<16x96xf32, #tpu.memory_space<vmem>>) attributes {dimension_semantics = [#tpu.dimension_semantics<parallel>], iteration_bounds = array<i64: 1>, scalar_prefetch = 0 : i64, scratch_operands = 0 : i64, tpu.core_type = #tpu.core_type<tc>, window_params = [{transform_indices = @transform_0, window_bounds = array<i64: 16, 32>}, {pipeline_mode = #tpu.pipeline_mode<synchronous>, transform_indices = @transform_1, window_bounds = array<i64: 1, 32>}, {pipeline_mode = #tpu.pipeline_mode<synchronous>, transform_indices = @transform_2, window_bounds = array<i64: 1, 32>}, {pipeline_mode = #tpu.pipeline_mode<synchronous>, transform_indices = @transform_3, window_bounds = array<i64: 32, 96>}, {pipeline_mode = #tpu.pipeline_mode<synchronous>, transform_indices = @transform_4, window_bounds = array<i64: 1, 96>}, {transform_indices = @transform_5, window_bounds = array<i64: 16, 96>}]} {
    %c0 = arith.constant 0 : index
    %c0_0 = arith.constant 0 : index
    %0 = vector.load %arg1[%c0, %c0_0] : memref<16x32xf32, #tpu.memory_space<vmem>>, vector<16x32xf32>
    %c0_1 = arith.constant 0 : index
    %c0_2 = arith.constant 0 : index
    %1 = vector.load %arg2[%c0_1, %c0_2] : memref<1x32xf32, #tpu.memory_space<vmem>>, vector<1x32xf32>
    %c0_3 = arith.constant 0 : index
    %c0_4 = arith.constant 0 : index
    %2 = vector.load %arg3[%c0_3, %c0_4] : memref<1x32xf32, #tpu.memory_space<vmem>>, vector<1x32xf32>
    %cst = arith.constant dense<0.000000e+00> : vector<16xf32>
    %3 = vector.multi_reduction <add>, %0, %cst [1] : vector<16x32xf32> to vector<16xf32>
    %4 = vector.shape_cast %3 : vector<16xf32> to vector<16x1xf32>
    %cst_5 = arith.constant 3.200000e+01 : f32
    %5 = vector.broadcast %cst_5 : f32 to vector<16x1xf32>
    %6 = arith.divf %4, %5 : vector<16x1xf32>
    %7 = vector.broadcast %6 : vector<16x1xf32> to vector<16x32xf32>
    %8 = arith.subf %0, %7 : vector<16x32xf32>
    %9 = arith.mulf %8, %8 : vector<16x32xf32>
    %cst_6 = arith.constant dense<0.000000e+00> : vector<16xf32>
    %10 = vector.multi_reduction <add>, %9, %cst_6 [1] : vector<16x32xf32> to vector<16xf32>
    %11 = vector.shape_cast %10 : vector<16xf32> to vector<16x1xf32>
    %cst_7 = arith.constant 3.100000e+01 : f32
    %12 = vector.broadcast %cst_7 : f32 to vector<16x1xf32>
    %13 = arith.divf %11, %12 : vector<16x1xf32>
    %14 = math.sqrt %13 : vector<16x1xf32>
    %15 = vector.broadcast %1 : vector<1x32xf32> to vector<16x32xf32>
    %16 = arith.mulf %15, %8 : vector<16x32xf32>
    %cst_8 = arith.constant 9.99999997E-7 : f32
    %17 = vector.broadcast %cst_8 : f32 to vector<16x1xf32>
    %18 = arith.addf %14, %17 : vector<16x1xf32>
    %19 = vector.broadcast %18 : vector<16x1xf32> to vector<16x32xf32>
    %20 = arith.divf %16, %19 : vector<16x32xf32>
    %21 = vector.broadcast %2 : vector<1x32xf32> to vector<16x32xf32>
    %22 = arith.addf %20, %21 : vector<16x32xf32>
    %c0_9 = arith.constant 0 : index
    %c0_10 = arith.constant 0 : index
    %23 = vector.load %arg4[%c0_9, %c0_10] : memref<32x96xf32, #tpu.memory_space<vmem>>, vector<32x96xf32>
    %cst_11 = arith.constant dense<0.000000e+00> : vector<16x96xf32>
    %24 = tpu.matmul %22, %23, %cst_11 {dimension_numbers = #tpu.dot_dimension_numbers<[1], [0], [0], [1], [0, 0, 1, 1], [], []>} : vector<16x32xf32>, vector<32x96xf32>, vector<16x96xf32> -> vector<16x96xf32>
    %c0_12 = arith.constant 0 : index
    %c0_13 = arith.constant 0 : index
    %25 = vector.load %arg5[%c0_12, %c0_13] : memref<1x96xf32, #tpu.memory_space<vmem>>, vector<1x96xf32>
    %26 = vector.broadcast %25 : vector<1x96xf32> to vector<16x96xf32>
    %27 = arith.addf %24, %26 : vector<16x96xf32>
    %c0_14 = arith.constant 0 : index
    %c0_15 = arith.constant 0 : index
    %28 = vector.load %arg6[%c0_14, %c0_15] : memref<16x96xf32, #tpu.memory_space<vmem>>, vector<16x96xf32>
    tpu.vector_store %arg6[%c0_14, %c0_15], %27 {strides = array<i32>} : memref<16x96xf32, #tpu.memory_space<vmem>>, vector<16x96xf32>,
    return
  }
  func.func @transform_0(%arg0: i32) -> (i32, i32) {
    %c0_i32 = arith.constant 0 : i32
    %c0_i32_0 = arith.constant 0 : i32
    return %arg0, %c0_i32 : i32, i32
  }
  func.func @transform_1(%arg0: i32) -> (i32, i32) {
    %c0_i32 = arith.constant 0 : i32
    %c0_i32_0 = arith.constant 0 : i32
    %c0_i32_1 = arith.constant 0 : i32
    return %c0_i32, %c0_i32_0 : i32, i32
  }
  func.func @transform_2(%arg0: i32) -> (i32, i32) {
    %c0_i32 = arith.constant 0 : i32
    %c0_i32_0 = arith.constant 0 : i32
    %c0_i32_1 = arith.constant 0 : i32
    return %c0_i32, %c0_i32_0 : i32, i32
  }
  func.func @transform_3(%arg0: i32) -> (i32, i32) {
    %c0_i32 = arith.constant 0 : i32
    %c0_i32_0 = arith.constant 0 : i32
    %c0_i32_1 = arith.constant 0 : i32
    return %c0_i32, %c0_i32_0 : i32, i32
  }
  func.func @transform_4(%arg0: i32) -> (i32, i32) {
    %c0_i32 = arith.constant 0 : i32
    %c0_i32_0 = arith.constant 0 : i32
    %c0_i32_1 = arith.constant 0 : i32
    return %c0_i32, %c0_i32_0 : i32, i32
  }
  func.func @transform_5(%arg0: i32) -> (i32, i32) {
    %c0_i32 = arith.constant 0 : i32
    %c0_i32_0 = arith.constant 0 : i32
    return %arg0, %c0_i32 : i32, i32
  }
}

</mosaic_0001>

<llo_original>
// kernel: tpu_custom_call.1
$region0: #{tpu_custom_call.1}
  #allocation0 [shape = 'u32[]', space=smem, size = 0x4, offset = 0x4, fixed_abs, tag = 'smem constant byte address 0x4 - core index']
  #allocation1 [shape = 'u32[144,128]{1,0:T(1,128)}', space=vmem, size = 0x12000, scoped, tag = 'internal scratch']
  %s0 = inlined_call_operand.hbm [shape: f32[16,32], index: 0, kind: input, shape index: {}]
  %s1 = inlined_call_operand.vmem [shape: f32[1,32], index: 1, kind: input, shape index: {}]
  %s2 = inlined_call_operand.vmem [shape: f32[1,32], index: 2, kind: input, shape index: {}]
  %s3 = inlined_call_operand.hbm [shape: f32[32,96], index: 3, kind: input, shape index: {}]
  %s4 = inlined_call_operand.vmem [shape: f32[1,96], index: 4, kind: input, shape index: {}]
  %s5 = inlined_call_operand.hbm [shape: f32[16,96], index: 5, kind: output, shape index: {}]
  %s6 = sld [smem:[#allocation0]]
  $region38: #{tpu_custom_call.1} parent=0
    _
  %s8 = ssub.s32 1, %s6
  %s9 = scalar_select 0, %s8, %s6
  $region1: #{tpu_custom_call.1} parent=0
    #allocation2 [shape = 'u8[8192]{0}', space=vmem, size = 0x2000, scoped, tag = 'input window, operand 0, single buffered']
    #allocation3 [shape = 's32[1]{0}', space=sflag, size = 0x4, scoped, tag = 'scoped memory for tpu_custom_call.1']
    #allocation4 [shape = 's32[1]{0}', space=sflag, size = 0x4, scoped, tag = 'scoped memory for tpu_custom_call.1']
    #allocation5 [shape = 'u8[16384]{0}', space=vmem, size = 0x4000, scoped, tag = 'input window, operand 3, single buffered']
    #allocation6 [shape = 's32[1]{0}', space=sflag, size = 0x4, scoped, tag = 'scoped memory for tpu_custom_call.1']
    #allocation7 [shape = 'u8[8192]{0}', space=vmem, size = 0x2000, scoped, tag = 'output window, operand 0, single buffered']
    %10 = vsyncpa [#allocation3], 0
    %11 = vsyncpa [#allocation6], 0
    %12 = vsyncpa [#allocation4], 0
    // Predicated region
    $region2: #{tpu_custom_call.1} parent=1 // pred_check
      _
    $region3: #{tpu_custom_call.1} parent=1 // pred_check_branch
      %14 = sbr.rel (0) target = $region5
    $region4: #{tpu_custom_call.1} parent=1 // pred_region
      %s16 = ssub.s32 256, 256
      %17 = vsyncadd [#allocation3], %s16
      %s18 = sshll.u32 [#allocation2], 4
      %s19 = int_to_ptr.vmem [resolvable:$true] %s18
      %24 = dma.hbm_to_vmem [thread:$0]  %s0, 256, %s19, [#allocation3], 128, 128, 8
    $region5: #{tpu_custom_call.1} parent=1 // pred_fallthru
      _
    // Predicated region
    $region6: #{tpu_custom_call.1} parent=1 // pred_check
      _
    $region7: #{tpu_custom_call.1} parent=1 // pred_check_branch
      %26 = sbr.rel (0) target = $region9
    $region8: #{tpu_custom_call.1} parent=1 // pred_region
      _
    $region9: #{tpu_custom_call.1} parent=1 // pred_fallthru
      _
    // Predicated region
    $region10: #{tpu_custom_call.1} parent=1 // pred_check
      _
    $region11: #{tpu_custom_call.1} parent=1 // pred_check_branch
      %28 = sbr.rel (0) target = $region13
    $region12: #{tpu_custom_call.1} parent=1 // pred_region
      _
    $region13: #{tpu_custom_call.1} parent=1 // pred_fallthru
      _
    // Predicated region
    $region14: #{tpu_custom_call.1} parent=1 // pred_check
      _
    $region15: #{tpu_custom_call.1} parent=1 // pred_check_branch
      %30 = sbr.rel (0) target = $region17
    $region16: #{tpu_custom_call.1} parent=1 // pred_region
      %s32 = ssub.s32 512, 512
      %33 = vsyncadd [#allocation6], %s32
      %s34 = sshll.u32 [#allocation5], 4
      %s35 = int_to_ptr.vmem [resolvable:$true] %s34
      %40 = dma.hbm_to_vmem [thread:$0]  %s3, 512, %s35, [#allocation6], 128, 128, 8
    $region17: #{tpu_custom_call.1} parent=1 // pred_fallthru
      _
    // Predicated region
    $region18: #{tpu_custom_call.1} parent=1 // pred_check
      _
    $region19: #{tpu_custom_call.1} parent=1 // pred_check_branch
      %42 = sbr.rel (0) target = $region21
    $region20: #{tpu_custom_call.1} parent=1 // pred_region
      _
    $region21: #{tpu_custom_call.1} parent=1 // pred_fallthru
      _
    // Predicated region
    $region22: #{tpu_custom_call.1} parent=1 // pred_check
      _
    $region23: #{tpu_custom_call.1} parent=1 // pred_check_branch
      %44 = sbr.rel (0) target = $region25
    $region24: #{tpu_custom_call.1} parent=1 // pred_region
      %45 = dma.done [#allocation3], 256
    $region25: #{tpu_custom_call.1} parent=1 // pred_fallthru
      _
    // Predicated region
    $region26: #{tpu_custom_call.1} parent=1 // pred_check
      _
    $region27: #{tpu_custom_call.1} parent=1 // pred_check_branch
      %47 = sbr.rel (0) target = $region29
    $region28: #{tpu_custom_call.1} parent=1 // pred_region
      %48 = dma.done [#allocation6], 512
    $region29: #{tpu_custom_call.1} parent=1 // pred_fallthru
      _
    %v49 = vld [vmem:[#allocation2] sm:$0xff]
    %v50 = vld [vmem:[#allocation2 + $0x8] sm:$0xff]
    %v51 = vld [vmem:[%s1] sm:$0x1]
    %v52 = vld [vmem:[%s2] sm:$0x1]
    %vm53 = vcmask 261120
    %v54 = vsel %vm53, %v49, 0.0
    %55 = vadd.xlane.f32.xlu0 %v54
    %v56 = vpop.xlane.xlu0 %55
    %v57 = vsel %vm53, %v50, 0.0
    %58 = vadd.xlane.f32.xlu0 %v57
    %v59 = vpop.xlane.xlu0 %58
    %v60 = vrcp.pop 32.0
    %v61 = vmul.f32 %v56, %v60
    %v62 = vmul.f32 %v59, %v60
    %v63 = vsub.f32 %v49, %v61
    %v64 = vsub.f32 %v50, %v62
    %v65 = vmul.f32 %v63, %v63
    %v66 = vmul.f32 %v64, %v64
    %v67 = vsel %vm53, %v65, 0.0
    %68 = vadd.xlane.f32.xlu0 %v67
    %v69 = vpop.xlane.xlu0 %68
    %v70 = vsel %vm53, %v66, 0.0
    %71 = vadd.xlane.f32.xlu0 %v70
    %v72 = vpop.xlane.xlu0 %71
    %v73 = vrcp.pop 31.0
    %v74 = vmul.f32 %v69, %v73
    %v75 = vmul.f32 %v72, %v73
    %v76 = vrsqrt.pop %v74
    %v77 = vmul.f32 %v74, %v76
    %vm78 = vcmp.eq.f32.partialorder %v74, inf
    %v79 = vsel %vm78, %v74, %v77
    %vm80 = vcmp.eq.f32.partialorder %v74, 0.0
    %v81 = vand.u32 %v74, 2147483648
    %v82 = vsel %vm80, %v81, %v79
    %v83 = vrsqrt.pop %v75
    %v84 = vmul.f32 %v75, %v83
    %vm85 = vcmp.eq.f32.partialorder %v75, inf
    %v86 = vsel %vm85, %v75, %v84
    %vm87 = vcmp.eq.f32.partialorder %v75, 0.0
    %v88 = vand.u32 %v75, 2147483648
    %v89 = vsel %vm87, %v88, %v86
    %v91 = vlaneseq
    %v92 = vshrl.u32 %v91, 7
    %v93 = vsub.s32 0, %v92
    %v94 = vrot.slane %v51, %v93
    %v96 = vmul.f32 %v94, %v63
    %v97 = vmul.f32 %v94, %v64
    %v98 = vadd.f32 %v82, 1e-06
    %v99 = vadd.f32 %v89, 1e-06
    %v100 = vrcp.pop %v98
    %v101 = vmul.f32 %v96, %v100
    %v102 = vrcp.pop %v99
    %v103 = vmul.f32 %v97, %v102
    %v105 = vlaneseq
    %v106 = vshrl.u32 %v105, 7
    %v107 = vsub.s32 0, %v106
    %v108 = vrot.slane %v52, %v107
    %v110 = vadd.f32 %v101, %v108
    %v111 = vadd.f32 %v103, %v108
    %v112 = vld [vmem:[#allocation5] sm:$0xff]
    %v113 = vld [vmem:[#allocation5 + $0x8] sm:$0xff]
    %v114 = vld [vmem:[#allocation5 + $0x10] sm:$0xff]
    %v115 = vld [vmem:[#allocation5 + $0x18] sm:$0xff]
    %v116 = vld [vmem:[%s4] sm:$0x1]
    %v118 = vlaneseq
    %v119 = vshrl.u32 %v118, 7
    %v120 = vsub.s32 0, %v119
    %v121 = vrot.slane %v116, %v120
    %v124 = vsel %vm53, %v110, 0
    %v127 = vsel %vm53, %v111, 0
    %129 = vmatprep.subr.mxu0 0.0
    %130 = vmatpush1.msra.mxu0 %v112
    %131 = vmatprep.subr.mxu0 0.0
    %132 = vmatpush1.msra.mxu0 %v113
    %133 = vmatprep.subr.mxu0 0.0
    %134 = vmatpush1.msra.mxu0 %v114
    %135 = vmatprep.subr.mxu0 0.0
    %136 = vmatpush1.msra.mxu0 %v115
    %137 = vmatprep.subr.mxu0 0.0
    %138 = vmatpush1.msra.mxu0 0.0
    %139 = vmatprep.subr.mxu0 0.0
    %140 = vmatpush1.msra.mxu0 0.0
    %141 = vmatprep.subr.mxu0 0.0
    %142 = vmatpush1.msra.mxu0 0.0
    %143 = vmatprep.subr.mxu0 0.0
    %144 = vmatpush1.msra.mxu0 0.0
    %145 = vmatprep.subr.mxu0 0.0
    %146 = vmatpush1.msra.mxu0 0.0
    %147 = vmatprep.subr.mxu0 0.0
    %148 = vmatpush1.msra.mxu0 0.0
    %149 = vmatprep.subr.mxu0 0.0
    %150 = vmatpush1.msra.mxu0 0.0
    %151 = vmatprep.subr.mxu0 0.0
    %152 = vmatpush1.msra.mxu0 0.0
    %153 = vmatprep.subr.mxu0 0.0
    %154 = vmatpush1.msra.mxu0 0.0
    %155 = vmatprep.subr.mxu0 0.0
    %156 = vmatpush1.msra.mxu0 0.0
    %157 = vmatprep.subr.mxu0 0.0
    %158 = vmatpush1.msra.mxu0 0.0
    %159 = vmatprep.subr.mxu0 0.0
    %160 = vmatpush1.msra.mxu0 0.0
    %161 = vmatprep.subr.mxu0 0.0
    %162 = vmatpush1.msra.mxu0 0.0
    %163 = vmatprep.subr.mxu0 0.0
    %164 = vmatpush1.msra.mxu0 0.0
    %165 = vmatprep.subr.mxu0 0.0
    %166 = vmatpush1.msra.mxu0 0.0
    %167 = vmatprep.subr.mxu0 0.0
    %168 = vmatpush1.msra.mxu0 0.0
    %169 = vmatprep.subr.mxu0 0.0
    %170 = vmatpush1.msra.mxu0 0.0
    %171 = vmatprep.subr.mxu0 0.0
    %172 = vmatpush1.msra.mxu0 0.0
    %173 = vmatprep.subr.mxu0 0.0
    %174 = vmatpush1.msra.mxu0 0.0
    %175 = vmatprep.subr.mxu0 0.0
    %176 = vmatpush1.msra.mxu0 0.0
    %177 = vmatprep.subr.mxu0 0.0
    %178 = vmatpush1.msra.mxu0 0.0
    %179 = vmatprep.subr.mxu0 0.0
    %180 = vmatpush1.msra.mxu0 0.0
    %181 = vmatprep.subr.mxu0 0.0
    %182 = vmatpush1.msra.mxu0 0.0
    %183 = vmatprep.subr.mxu0 0.0
    %184 = vmatpush1.msra.mxu0 0.0
    %185 = vmatprep.subr.mxu0 0.0
    %186 = vmatpush1.msra.mxu0 0.0
    %187 = vmatprep.subr.mxu0 0.0
    %188 = vmatpush1.msra.mxu0 0.0
    %189 = vmatprep.subr.mxu0 0.0
    %190 = vmatpush1.msra.mxu0 0.0
    %191 = vmatprep.subr.mxu0 0.0
    %192 = vmatpush1.msra.mxu0 0.0
    %193 = vmatprep.mubr.f32.mxu0 0.0
    %194 = vmatmul.mubr.f32.gmra.mrb[0].mxu0 %v124
    %v195 = vpop.f32.mrb[0].mxu0
    %v196 = vadd.f32 %v121, %v195
    %v197 = vpop.f32.mrb[0].mxu0
    %198 = vmatprep.mubr.f32.mxu0 0.0
    %199 = vmatmul.mubr.f32.gmra.mrb[0].mxu0 %v127
    %v200 = vpop.f32.mrb[0].mxu0
    %v201 = vadd.f32 %v121, %v200
    %v202 = vpop.f32.mrb[0].mxu0
    %203 = vdwg.mxu0
    %vm204 = vcmask 785408
    %205 = vst.msk [vmem:[#allocation7] sm:$0xff] %vm204, %v196
    %206 = vst.msk [vmem:[#allocation7 + $0x8] sm:$0xff] %vm204, %v201
    // Predicated region
    $region30: #{tpu_custom_call.1} parent=1 // pred_check
      _
    $region31: #{tpu_custom_call.1} parent=1 // pred_check_branch
      %208 = sbr.rel (0) target = $region33
    $region32: #{tpu_custom_call.1} parent=1 // pred_region
      %s210 = ssub.s32 256, 256
      %211 = vsyncadd [#allocation4], %s210
      %s212 = sshll.u32 [#allocation7], 4
      %s213 = int_to_ptr.vmem [resolvable:$true] %s212
      %218 = dma.vmem_to_hbm [thread:$0]  %s213, 256, %s5, [#allocation4], 128, 128, 8
    $region33: #{tpu_custom_call.1} parent=1 // pred_fallthru
      _
    // Predicated region
    $region34: #{tpu_custom_call.1} parent=1 // pred_check
      _
    $region35: #{tpu_custom_call.1} parent=1 // pred_check_branch
      %220 = sbr.rel (0) target = $region37
    $region36: #{tpu_custom_call.1} parent=1 // pred_region
      %221 = dma.done [#allocation4], 256
    $region37: #{tpu_custom_call.1} parent=1 // pred_fallthru
      _
    %222 = vsyncpa [#allocation3], 1
    %223 = vsyncpa [#allocation6], 1
    %224 = vsyncpa [#allocation4], 1

</llo_original>
